<compile_context>
chip_gen: v7x
topology: tpu7x:2x2x1
jax: 0.10.0
libtpu: 0.0.40
codegen_flags: <defaults>
</compile_context>

<pallas_src>
import functools

import jax
import jax.numpy as jnp
from jax import lax
from jax.experimental import pallas as pl
from jax.experimental.pallas import tpu as pltpu


def _round_up(x, m):
    return (x + m - 1) // m * m


def _evaluator_loss_kernel(start_logits_ref, end_logits_ref,
                           start_idx_ref, end_idx_ref, out_ref, *, batch_size):
    """Per-tile span-NLL partial sum, written lane-dense to a (1, 1, 128) block."""
    start_logits = start_logits_ref[...].astype(jnp.float32)
    end_logits = end_logits_ref[...].astype(jnp.float32)
    tb, s = start_logits.shape

    # Hoisted once; shared by both NLLs (JAX does not CSE broadcast_in_dim).
    cols = lax.broadcasted_iota(jnp.int32, (tb, s), 1)

    def nll(logits, idx):
        m = jnp.max(logits, axis=-1, keepdims=True)                   # (tb, 1)
        z = logits - m                                                 # (tb, s)
        lse = jnp.log(jnp.sum(jnp.exp(z), axis=-1, keepdims=True))     # (tb, 1)
        sel = jnp.sum(jnp.where(cols == idx, z, 0.0),
                      axis=-1, keepdims=True)                          # (tb, 1)
        return lse - sel                                               # -log p[idx]

    loss = nll(start_logits, start_idx_ref[...]) + nll(end_logits, end_idx_ref[...])

    # Mask rows that belong to grid padding (batch rounded up to a tile multiple).
    row = pl.program_id(0) * tb + lax.broadcasted_iota(jnp.int32, (tb, 1), 0)
    loss = jnp.where(row < batch_size, loss, 0.0)

    # Lane-dense, unmasked writeback: broadcast tile partial sum across 128 lanes.
    out_ref[...] = jnp.broadcast_to(jnp.sum(loss), out_ref.shape)


def evaluator_forward(start_logits, end_logits, start_idx, end_idx, *, tb=None):
    """Pallas-backed evaluator forward.

    Args:
      start_logits: (B, S) float32/bfloat16 span-start logits.
      end_logits:   (B, S) float32/bfloat16 span-end logits.
      start_idx:    (B, 1) int32 ground-truth start positions in [0, S).
      end_idx:      (B, 1) int32 ground-truth end positions in [0, S).
    Returns:
      scalar float32 mean span loss over the batch.
    """
    B, S = start_logits.shape
    itemsize = jnp.dtype(start_logits.dtype).itemsize

    if tb is None:
        # ~2 MiB per logit tile => 2 inputs x 2 pipeline buffers x 2 MiB = 8 MiB
        # resident; fits v5e's 16 MiB scoped-VMEM default and v7x's 64 MiB VMEM.
        target_bytes = 2 * 1024 * 1024
        tb = max(8, (target_bytes // max(1, S * itemsize)) // 8 * 8)
    tb = int(min(tb, _round_up(B, 8)))

    num_tiles = pl.cdiv(B, tb)
    b_padded = num_tiles * tb
    if b_padded != B:
        pad = b_padded - B
        start_logits = jnp.pad(start_logits, ((0, pad), (0, 0)))
        end_logits = jnp.pad(end_logits, ((0, pad), (0, 0)))
        start_idx = jnp.pad(start_idx, ((0, pad), (0, 0)))
        end_idx = jnp.pad(end_idx, ((0, pad), (0, 0)))

    kernel = functools.partial(_evaluator_loss_kernel, batch_size=B)

    partials = pl.pallas_call(
        kernel,
        out_shape=jax.ShapeDtypeStruct((num_tiles, 1, 128), jnp.float32),
        grid_spec=pltpu.PrefetchScalarGridSpec(
            num_scalar_prefetch=0,
            grid=(num_tiles,),
            in_specs=[
                pl.BlockSpec((tb, S), lambda i: (i, 0)),
                pl.BlockSpec((tb, S), lambda i: (i, 0)),
                pl.BlockSpec((tb, 1), lambda i: (i, 0)),
                pl.BlockSpec((tb, 1), lambda i: (i, 0)),
            ],
            out_specs=pl.BlockSpec((1, 1, 128), lambda i: (i, 0, 0)),
        ),
        compiler_params=pltpu.CompilerParams(
            dimension_semantics=("parallel",)),
    )(start_logits, end_logits, start_idx, end_idx)

    # Tiny glue: per-tile partial sums -> batch mean.
    return jnp.sum(partials[:, 0, 0]) / B


def _reference(start_logits, end_logits, start_idx, end_idx):
    def nll(logits, idx):
        logp = jax.nn.log_softmax(logits.astype(jnp.float32), axis=-1)
        return -jnp.take_along_axis(logp, idx, axis=-1)
    return jnp.mean(nll(start_logits, start_idx) + nll(end_logits, end_idx))


if __name__ == "__main__":
    key = jax.random.PRNGKey(0)

    # Case 1: lane-aligned small shapes.
    B, S = 8, 512
    k1, k2, k3, k4, k5 = jax.random.split(key, 5)
    start_logits = jax.random.normal(k1, (B, S), dtype=jnp.float32)
    end_logits = jax.random.normal(k2, (B, S), dtype=jnp.float32)
    start_idx = jax.random.randint(k3, (B, 1), 0, S, dtype=jnp.int32)
    end_idx = jax.random.randint(k4, (B, 1), 0, S, dtype=jnp.int32)

    loss = evaluator_forward(start_logits, end_logits, start_idx, end_idx)
    jax.block_until_ready(loss)
    ref = _reference(start_logits, end_logits, start_idx, end_idx)
    assert jnp.allclose(loss, ref, atol=1e-5, rtol=1e-5), (loss, ref)

    # Case 2: batch not a multiple of the tile (exercises padding/masking path).
    B2, S2 = 10, 384
    j1, j2, j3, j4 = jax.random.split(k5, 4)
    sl2 = jax.random.normal(j1, (B2, S2), dtype=jnp.float32)
    el2 = jax.random.normal(j2, (B2, S2), dtype=jnp.float32)
    si2 = jax.random.randint(j3, (B2, 1), 0, S2, dtype=jnp.int32)
    ei2 = jax.random.randint(j4, (B2, 1), 0, S2, dtype=jnp.int32)
    loss2 = evaluator_forward(sl2, el2, si2, ei2)
    jax.block_until_ready(loss2)
    ref2 = _reference(sl2, el2, si2, ei2)
    assert jnp.allclose(loss2, ref2, atol=1e-5, rtol=1e-5), (loss2, ref2)

    print("KERNEL_OK")
</pallas_src>

<mosaic_0001>
module attributes {stable_mosaic.version = 11 : i64} {
  func.func @_evaluator_loss_kernel(%arg0: i32, %arg1: memref<8x512xf32, #tpu.memory_space<vmem>>, %arg2: memref<8x512xf32, #tpu.memory_space<vmem>>, %arg3: memref<8x1xi32, #tpu.memory_space<vmem>>, %arg4: memref<8x1xi32, #tpu.memory_space<vmem>>, %arg5: memref<1x1x128xf32, #tpu.memory_space<vmem>>) attributes {dimension_semantics = [#tpu.dimension_semantics<parallel>], iteration_bounds = array<i64: 1>, scalar_prefetch = 0 : i64, scratch_operands = 0 : i64, tpu.core_type = #tpu.core_type<tc>, window_params = [{transform_indices = @transform_0, window_bounds = array<i64: 8, 512>}, {transform_indices = @transform_1, window_bounds = array<i64: 8, 512>}, {transform_indices = @transform_2, window_bounds = array<i64: 8, 1>}, {transform_indices = @transform_3, window_bounds = array<i64: 8, 1>}, {transform_indices = @transform_4, window_bounds = array<i64: 1, 1, 128>}]} {
    %c0 = arith.constant 0 : index
    %c0_0 = arith.constant 0 : index
    %0 = vector.load %arg1[%c0, %c0_0] : memref<8x512xf32, #tpu.memory_space<vmem>>, vector<8x512xf32>
    %c0_1 = arith.constant 0 : index
    %c0_2 = arith.constant 0 : index
    %1 = vector.load %arg2[%c0_1, %c0_2] : memref<8x512xf32, #tpu.memory_space<vmem>>, vector<8x512xf32>
    %2 = tpu.iota {dimensions = array<i32: 1>} : vector<8x512xi32>
    %c0_3 = arith.constant 0 : index
    %c0_4 = arith.constant 0 : index
    %3 = vector.load %arg3[%c0_3, %c0_4] : memref<8x1xi32, #tpu.memory_space<vmem>>, vector<8x1xi32>
    %cst = arith.constant dense<0xFF800000> : vector<8xf32>
    %4 = vector.multi_reduction <maximumf>, %0, %cst [1] : vector<8x512xf32> to vector<8xf32>
    %5 = vector.shape_cast %4 : vector<8xf32> to vector<8x1xf32>
    %6 = vector.broadcast %5 : vector<8x1xf32> to vector<8x512xf32>
    %7 = arith.subf %0, %6 : vector<8x512xf32>
    %8 = math.exp %7 : vector<8x512xf32>
    %cst_5 = arith.constant dense<0.000000e+00> : vector<8xf32>
    %9 = vector.multi_reduction <add>, %8, %cst_5 [1] : vector<8x512xf32> to vector<8xf32>
    %10 = vector.shape_cast %9 : vector<8xf32> to vector<8x1xf32>
    %11 = math.log %10 : vector<8x1xf32>
    %12 = vector.broadcast %3 : vector<8x1xi32> to vector<8x512xi32>
    %13 = arith.cmpi eq, %2, %12 : vector<8x512xi32>
    %cst_6 = arith.constant 0.000000e+00 : f32
    %14 = vector.broadcast %cst_6 : f32 to vector<8x512xf32>
    %15 = arith.select %13, %7, %14 : vector<8x512xi1>, vector<8x512xf32>
    %cst_7 = arith.constant dense<0.000000e+00> : vector<8xf32>
    %16 = vector.multi_reduction <add>, %15, %cst_7 [1] : vector<8x512xf32> to vector<8xf32>
    %17 = vector.shape_cast %16 : vector<8xf32> to vector<8x1xf32>
    %18 = arith.subf %11, %17 : vector<8x1xf32>
    %c0_8 = arith.constant 0 : index
    %c0_9 = arith.constant 0 : index
    %19 = vector.load %arg4[%c0_8, %c0_9] : memref<8x1xi32, #tpu.memory_space<vmem>>, vector<8x1xi32>
    %cst_10 = arith.constant dense<0xFF800000> : vector<8xf32>
    %20 = vector.multi_reduction <maximumf>, %1, %cst_10 [1] : vector<8x512xf32> to vector<8xf32>
    %21 = vector.shape_cast %20 : vector<8xf32> to vector<8x1xf32>
    %22 = vector.broadcast %21 : vector<8x1xf32> to vector<8x512xf32>
    %23 = arith.subf %1, %22 : vector<8x512xf32>
    %24 = math.exp %23 : vector<8x512xf32>
    %cst_11 = arith.constant dense<0.000000e+00> : vector<8xf32>
    %25 = vector.multi_reduction <add>, %24, %cst_11 [1] : vector<8x512xf32> to vector<8xf32>
    %26 = vector.shape_cast %25 : vector<8xf32> to vector<8x1xf32>
    %27 = math.log %26 : vector<8x1xf32>
    %28 = vector.broadcast %19 : vector<8x1xi32> to vector<8x512xi32>
    %29 = arith.cmpi eq, %2, %28 : vector<8x512xi32>
    %cst_12 = arith.constant 0.000000e+00 : f32
    %30 = vector.broadcast %cst_12 : f32 to vector<8x512xf32>
    %31 = arith.select %29, %23, %30 : vector<8x512xi1>, vector<8x512xf32>
    %cst_13 = arith.constant dense<0.000000e+00> : vector<8xf32>
    %32 = vector.multi_reduction <add>, %31, %cst_13 [1] : vector<8x512xf32> to vector<8xf32>
    %33 = vector.shape_cast %32 : vector<8xf32> to vector<8x1xf32>
    %34 = arith.subf %27, %33 : vector<8x1xf32>
    %35 = arith.addf %18, %34 : vector<8x1xf32>
    %c8_i32 = arith.constant 8 : i32
    %36 = arith.muli %arg0, %c8_i32 : i32
    %37 = tpu.iota {dimensions = array<i32: 0>} : vector<8x1xi32>
    %38 = vector.broadcast %36 : i32 to vector<8x1xi32>
    %39 = arith.addi %38, %37 : vector<8x1xi32>
    %c8_i32_14 = arith.constant 8 : i32
    %40 = vector.broadcast %c8_i32_14 : i32 to vector<8x1xi32>
    %41 = arith.cmpi slt, %39, %40 : vector<8x1xi32>
    %cst_15 = arith.constant 0.000000e+00 : f32
    %42 = vector.broadcast %cst_15 : f32 to vector<8x1xf32>
    %43 = arith.select %41, %35, %42 : vector<8x1xi1>, vector<8x1xf32>
    %44 = vector.shape_cast %43 : vector<8x1xf32> to vector<1x8x1xf32>
    %cst_16 = arith.constant dense<0.000000e+00> : vector<1xf32>
    %45 = vector.multi_reduction <add>, %44, %cst_16 [1, 2] : vector<1x8x1xf32> to vector<1xf32>
    %46 = vector.shape_cast %45 : vector<1xf32> to vector<1x1x1xf32>
    %47 = vector.extract %46[0, 0, 0] : f32 from vector<1x1x1xf32>
    %48 = vector.broadcast %47 : f32 to vector<1x1x128xf32>
    %c0_17 = arith.constant 0 : index
    %c0_18 = arith.constant 0 : index
    %c0_19 = arith.constant 0 : index
    %49 = vector.load %arg5[%c0_17, %c0_18, %c0_19] : memref<1x1x128xf32, #tpu.memory_space<vmem>>, vector<1x1x128xf32>
    tpu.vector_store %arg5[%c0_17, %c0_18, %c0_19], %48 {strides = array<i32>} : memref<1x1x128xf32, #tpu.memory_space<vmem>>, vector<1x1x128xf32>,
    return
  }
  func.func @transform_0(%arg0: i32) -> (i32, i32) {
    %c0_i32 = arith.constant 0 : i32
    %c0_i32_0 = arith.constant 0 : i32
    return %arg0, %c0_i32 : i32, i32
  }
  func.func @transform_1(%arg0: i32) -> (i32, i32) {
    %c0_i32 = arith.constant 0 : i32
    %c0_i32_0 = arith.constant 0 : i32
    return %arg0, %c0_i32 : i32, i32
  }
  func.func @transform_2(%arg0: i32) -> (i32, i32) {
    %c0_i32 = arith.constant 0 : i32
    %c0_i32_0 = arith.constant 0 : i32
    return %arg0, %c0_i32 : i32, i32
  }
  func.func @transform_3(%arg0: i32) -> (i32, i32) {
    %c0_i32 = arith.constant 0 : i32
    %c0_i32_0 = arith.constant 0 : i32
    return %arg0, %c0_i32 : i32, i32
  }
  func.func @transform_4(%arg0: i32) -> (i32, i32, i32) {
    %c0_i32 = arith.constant 0 : i32
    %c0_i32_0 = arith.constant 0 : i32
    %c0_i32_1 = arith.constant 0 : i32
    return %arg0, %c0_i32, %c0_i32_0 : i32, i32, i32
  }
}

</mosaic_0001>

<llo_original>
// kernel: tpu_custom_call.1
$region0: #{tpu_custom_call.1}
  #allocation0 [shape = 'u32[]', space=smem, size = 0x4, offset = 0x4, fixed_abs, tag = 'smem constant byte address 0x4 - core index']
  #allocation1 [shape = 'u32[144,128]{1,0:T(1,128)}', space=vmem, size = 0x12000, scoped, tag = 'internal scratch']
  %s0 = inlined_call_operand.hbm [shape: f32[8,512], index: 0, kind: input, shape index: {}]
  %s1 = inlined_call_operand.hbm [shape: f32[8,512], index: 1, kind: input, shape index: {}]
  %s2 = inlined_call_operand.vmem [shape: s32[8,1], index: 2, kind: input, shape index: {}]
  %s3 = inlined_call_operand.vmem [shape: s32[8,1], index: 3, kind: input, shape index: {}]
  %s4 = inlined_call_operand.hbm [shape: f32[1,1,128], index: 4, kind: output, shape index: {}]
  %s5 = sld [smem:[#allocation0]]
  $region34: #{tpu_custom_call.1} parent=0
    _
  %s7 = ssub.s32 1, %s5
  %s8 = scalar_select 0, %s7, %s5
  $region1: #{tpu_custom_call.1} parent=0
    #allocation2 [shape = 'u8[16384]{0}', space=vmem, size = 0x4000, scoped, tag = 'input window, operand 0, single buffered']
    #allocation3 [shape = 's32[1]{0}', space=sflag, size = 0x4, scoped, tag = 'scoped memory for tpu_custom_call.1']
    #allocation4 [shape = 's32[1]{0}', space=sflag, size = 0x4, scoped, tag = 'scoped memory for tpu_custom_call.1']
    #allocation5 [shape = 'u8[16384]{0}', space=vmem, size = 0x4000, scoped, tag = 'input window, operand 1, single buffered']
    #allocation6 [shape = 's32[1]{0}', space=sflag, size = 0x4, scoped, tag = 'scoped memory for tpu_custom_call.1']
    #allocation7 [shape = 'u8[512]{0}', space=vmem, size = 0x400, scoped, tag = 'output window, operand 0, single buffered']
    %9 = vsyncpa [#allocation3], 0
    %10 = vsyncpa [#allocation6], 0
    %11 = vsyncpa [#allocation4], 0
    // Predicated region
    $region2: #{tpu_custom_call.1} parent=1 // pred_check
      _
    $region3: #{tpu_custom_call.1} parent=1 // pred_check_branch
      %13 = sbr.rel (0) target = $region5
    $region4: #{tpu_custom_call.1} parent=1 // pred_region
      %s15 = ssub.s32 512, 512
      %16 = vsyncadd [#allocation3], %s15
      %s18 = sshll.u32 [#allocation2], 4
      %s19 = int_to_ptr.vmem [resolvable:$true] %s18
      %21 = dma.hbm_to_vmem [thread:$0]  %s0, 512, %s19, [#allocation3]
    $region5: #{tpu_custom_call.1} parent=1 // pred_fallthru
      _
    // Predicated region
    $region6: #{tpu_custom_call.1} parent=1 // pred_check
      _
    $region7: #{tpu_custom_call.1} parent=1 // pred_check_branch
      %23 = sbr.rel (0) target = $region9
    $region8: #{tpu_custom_call.1} parent=1 // pred_region
      %s25 = ssub.s32 512, 512
      %26 = vsyncadd [#allocation6], %s25
      %s28 = sshll.u32 [#allocation5], 4
      %s29 = int_to_ptr.vmem [resolvable:$true] %s28
      %31 = dma.hbm_to_vmem [thread:$0]  %s1, 512, %s29, [#allocation6]
    $region9: #{tpu_custom_call.1} parent=1 // pred_fallthru
      _
    // Predicated region
    $region10: #{tpu_custom_call.1} parent=1 // pred_check
      _
    $region11: #{tpu_custom_call.1} parent=1 // pred_check_branch
      %33 = sbr.rel (0) target = $region13
    $region12: #{tpu_custom_call.1} parent=1 // pred_region
      _
    $region13: #{tpu_custom_call.1} parent=1 // pred_fallthru
      _
    // Predicated region
    $region14: #{tpu_custom_call.1} parent=1 // pred_check
      _
    $region15: #{tpu_custom_call.1} parent=1 // pred_check_branch
      %35 = sbr.rel (0) target = $region17
    $region16: #{tpu_custom_call.1} parent=1 // pred_region
      _
    $region17: #{tpu_custom_call.1} parent=1 // pred_fallthru
      _
    // Predicated region
    $region18: #{tpu_custom_call.1} parent=1 // pred_check
      _
    $region19: #{tpu_custom_call.1} parent=1 // pred_check_branch
      %37 = sbr.rel (0) target = $region21
    $region20: #{tpu_custom_call.1} parent=1 // pred_region
      %38 = dma.done [#allocation3], 512
    $region21: #{tpu_custom_call.1} parent=1 // pred_fallthru
      _
    // Predicated region
    $region22: #{tpu_custom_call.1} parent=1 // pred_check
      _
    $region23: #{tpu_custom_call.1} parent=1 // pred_check_branch
      %40 = sbr.rel (0) target = $region25
    $region24: #{tpu_custom_call.1} parent=1 // pred_region
      %41 = dma.done [#allocation6], 512
    $region25: #{tpu_custom_call.1} parent=1 // pred_fallthru
      _
    %v42 = vld [vmem:[#allocation2] sm:$0xff]
    %v43 = vld [vmem:[#allocation2 + $0x8] sm:$0xff]
    %v44 = vld [vmem:[#allocation2 + $0x10] sm:$0xff]
    %v45 = vld [vmem:[#allocation2 + $0x18] sm:$0xff]
    %v46 = vld [vmem:[#allocation5] sm:$0xff]
    %v47 = vld [vmem:[#allocation5 + $0x8] sm:$0xff]
    %v48 = vld [vmem:[#allocation5 + $0x10] sm:$0xff]
    %v49 = vld [vmem:[#allocation5 + $0x18] sm:$0xff]
    %v50 = vlaneseq
    %v51 = vand.u32 %v50, 127
    %v52 = vadd.s32 %v51, 128
    %v53 = vadd.s32 %v51, 256
    %v54 = vadd.s32 %v51, 384
    %v55 = vld [vmem:[%s2] sm:$0xff]
    %v56 = vmax.f32 %v42, %v43
    %v57 = vmax.f32 %v44, %v45
    %v58 = vmax.f32 %v56, %v57
    %59 = vmax.xlane.f32.xlu0 %v58
    %v60 = vpop.xlane.xlu0 %59
    %v61 = vsub.f32 %v42, %v60
    %v62 = vsub.f32 %v43, %v60
    %v63 = vsub.f32 %v44, %v60
    %v64 = vsub.f32 %v45, %v60
    %v65 = vmul.f32 %v61, 1.442695
    %v66 = vpow.pop %v65
    %v67 = vmul.f32 %v62, 1.442695
    %v68 = vpow.pop %v67
    %v69 = vmul.f32 %v63, 1.442695
    %v70 = vpow.pop %v69
    %v71 = vmul.f32 %v64, 1.442695
    %v72 = vpow.pop %v71
    %v73 = vadd.f32 %v66, %v68
    %v74 = vadd.f32 %v73, %v70
    %v75 = vadd.f32 %v74, %v72
    %76 = vadd.xlane.f32.xlu0 %v75
    %v77 = vpop.xlane.xlu0 %76
    %v78 = vlog2.pop %v77
    %v79 = vmul.f32 %v78, 0.6931472
    %80 = vset.pattern.permute.xlu0 0
    %81 = vperm.xlu0 %80, %v55
    %v82 = vpop.permute.xlu0 %81
    %vm83 = vcmp.eq.s32.totalorder %v51, %v82
    %vm84 = vcmp.eq.s32.totalorder %v52, %v82
    %vm85 = vcmp.eq.s32.totalorder %v53, %v82
    %vm86 = vcmp.eq.s32.totalorder %v54, %v82
    %v87 = vsel %vm83, %v61, 0.0
    %v88 = vsel %vm84, %v62, 0.0
    %v89 = vsel %vm85, %v63, 0.0
    %v90 = vsel %vm86, %v64, 0.0
    %v91 = vadd.f32 %v87, %v88
    %v92 = vadd.f32 %v91, %v89
    %v93 = vadd.f32 %v92, %v90
    %94 = vadd.xlane.f32.xlu0 %v93
    %v95 = vpop.xlane.xlu0 %94
    %v96 = vsub.f32 %v79, %v95
    %v97 = vld [vmem:[%s3] sm:$0xff]
    %v98 = vmax.f32 %v46, %v47
    %v99 = vmax.f32 %v48, %v49
    %v100 = vmax.f32 %v98, %v99
    %101 = vmax.xlane.f32.xlu0 %v100
    %v102 = vpop.xlane.xlu0 %101
    %v103 = vsub.f32 %v46, %v102
    %v104 = vsub.f32 %v47, %v102
    %v105 = vsub.f32 %v48, %v102
    %v106 = vsub.f32 %v49, %v102
    %v107 = vmul.f32 %v103, 1.442695
    %v108 = vpow.pop %v107
    %v109 = vmul.f32 %v104, 1.442695
    %v110 = vpow.pop %v109
    %v111 = vmul.f32 %v105, 1.442695
    %v112 = vpow.pop %v111
    %v113 = vmul.f32 %v106, 1.442695
    %v114 = vpow.pop %v113
    %v115 = vadd.f32 %v108, %v110
    %v116 = vadd.f32 %v115, %v112
    %v117 = vadd.f32 %v116, %v114
    %118 = vadd.xlane.f32.xlu0 %v117
    %v119 = vpop.xlane.xlu0 %118
    %v120 = vlog2.pop %v119
    %v121 = vmul.f32 %v120, 0.6931472
    %122 = vset.pattern.permute.xlu0 0
    %123 = vperm.xlu0 %122, %v97
    %v124 = vpop.permute.xlu0 %123
    %vm125 = vcmp.eq.s32.totalorder %v51, %v124
    %vm126 = vcmp.eq.s32.totalorder %v52, %v124
    %vm127 = vcmp.eq.s32.totalorder %v53, %v124
    %vm128 = vcmp.eq.s32.totalorder %v54, %v124
    %v129 = vsel %vm125, %v103, 0.0
    %v130 = vsel %vm126, %v104, 0.0
    %v131 = vsel %vm127, %v105, 0.0
    %v132 = vsel %vm128, %v106, 0.0
    %v133 = vadd.f32 %v129, %v130
    %v134 = vadd.f32 %v133, %v131
    %v135 = vadd.f32 %v134, %v132
    %136 = vadd.xlane.f32.xlu0 %v135
    %v137 = vpop.xlane.xlu0 %136
    %v138 = vsub.f32 %v121, %v137
    %v139 = vadd.f32 %v96, %v138
    %s140 = smul.u32 0, 8
    %v141 = vlaneseq
    %v142 = vshrl.u32 %v141, 7
    %v143 = vstv %s140
    %v144 = vadd.s32 %v143, %v142
    %vm145 = vcmp.lt.s32.totalorder %v144, 8
    %v146 = vsel %vm145, %v139, 0.0
    %vm147 = vcmask 7168
    %v148 = vsel %vm147, %v146, 0.0
    %149 = vadd.xlane.f32.xlu0 %v148
    %v150 = vpop.xlane.xlu0 %149
    %v151 = vrot.slane %v150, 4
    %v152 = vadd.f32 %v150, %v151
    %v153 = vrot.slane %v152, 2
    %v154 = vadd.f32 %v152, %v153
    %v155 = vrot.slane %v154, 1
    %v156 = vadd.f32 %v154, %v155
    %s157 = vtos %v156
    %v158 = vstv %s157
    %159 = vst [vmem:[#allocation7] sm:$0x1] %v158
    // Predicated region
    $region26: #{tpu_custom_call.1} parent=1 // pred_check
      _
    $region27: #{tpu_custom_call.1} parent=1 // pred_check_branch
      %161 = sbr.rel (0) target = $region29
    $region28: #{tpu_custom_call.1} parent=1 // pred_region
      %s163 = ssub.s32 16, 16
      %164 = vsyncadd [#allocation4], %s163
      %s166 = sshll.u32 [#allocation7], 4
      %s167 = int_to_ptr.vmem [resolvable:$true] %s166
      %169 = dma.vmem_to_hbm [thread:$0]  %s167, 16, %s4, [#allocation4]
    $region29: #{tpu_custom_call.1} parent=1 // pred_fallthru
      _
    // Predicated region
    $region30: #{tpu_custom_call.1} parent=1 // pred_check
      _
    $region31: #{tpu_custom_call.1} parent=1 // pred_check_branch
      %171 = sbr.rel (0) target = $region33
    $region32: #{tpu_custom_call.1} parent=1 // pred_region
      %172 = dma.done [#allocation4], 16
    $region33: #{tpu_custom_call.1} parent=1 // pred_fallthru
      _
    %173 = vsyncpa [#allocation3], 1
    %174 = vsyncpa [#allocation6], 1
    %175 = vsyncpa [#allocation4], 1

</llo_original>
